<compile_context>
chip_gen: v7x
topology: tpu7x:2x2x1
jax: 0.10.0
libtpu: 0.0.40
codegen_flags: <defaults>
</compile_context>

<pallas_src>
import math

import jax
import jax.numpy as jnp
from jax.experimental import pallas as pl
from jax.experimental.pallas import tpu as pltpu


def _fused_linear_kernel(x_ref, wbt_ref, bb_ref, wt_ref, b_ref, out_ref,
                         feat_acc, out_acc):
    """Grid = (M tiles, F tiles, K tiles); K (backbone reduction) is last.

    x_ref   : [tb, tk]     bf16   input tile (flattened image rows)
    wbt_ref : [tk, tf]     bf16   backbone weight tile (pre-transposed [K, F])
    bb_ref  : [1,  tf]     f32    backbone bias tile
    wt_ref  : [tf, Cp]     bf16   head weight tile (pre-transposed [F, C])
    b_ref   : [1,  Cp]     f32    head bias
    out_ref : [tb, Cp]            final output tile (revisited across f, k)
    feat_acc: [tb, tf] f32 scratch — backbone feature accumulator (over K)
    out_acc : [tb, Cp] f32 scratch — head output accumulator (over F)
    """
    f = pl.program_id(1)
    k = pl.program_id(2)
    nf = pl.num_programs(1)
    nk = pl.num_programs(2)

    @pl.when(jnp.logical_and(f == 0, k == 0))
    def _():
        # Seed the output accumulator with the head bias (moves a VPU add +
        # broadcast off the per-M-tile epilogue critical path).
        out_acc[...] = jnp.broadcast_to(b_ref[...], out_acc.shape)

    @pl.when(k == 0)
    def _():
        feat_acc[...] = jnp.zeros_like(feat_acc)

    # Backbone partial product (natural NN contraction, weights pre-transposed
    # in the wrapper -> no XLU transpose feeding the MXU).
    feat_acc[...] += jnp.dot(x_ref[...], wbt_ref[...],
                             preferred_element_type=jnp.float32)

    # Once the K reduction for this F tile is done: add backbone bias and push
    # the feature slab through the nn.Linear head (accumulated over F tiles).
    @pl.when(k == nk - 1)
    def _():
        feat = (feat_acc[...] + bb_ref[...]).astype(wt_ref.dtype)
        out_acc[...] += jnp.dot(feat, wt_ref[...],
                                preferred_element_type=jnp.float32)

    @pl.when(jnp.logical_and(f == nf - 1, k == nk - 1))
    def _():
        out_ref[...] = out_acc[...].astype(out_ref.dtype)


def _round_up(x, m):
    return (x + m - 1) // m * m


def _vmem_tile_bytes(tb, tk, tf, c_pad, out_itemsize):
    """Per-grid-step VMEM working set: 2x double-buffering for every streamed
    operand (Pallas default pipelining) plus resident f32 scratch."""
    x_t = tb * tk * 2 * 2             # bf16 input tile
    wb_t = tk * tf * 2 * 2            # bf16 backbone weight tile
    w_t = tf * c_pad * 2 * 2          # bf16 head weight tile
    bb_t = tf * 4 * 2                 # f32 backbone bias tile
    b_t = c_pad * 4 * 2               # f32 head bias
    facc = tb * tf * 4                # f32 feature accumulator (scratch)
    oacc = tb * c_pad * 4             # f32 output accumulator (scratch)
    out_t = tb * c_pad * out_itemsize * 2
    return x_t + wb_t + w_t + bb_t + b_t + facc + oacc + out_t


def linear_model_forward(x_nchw, wb, bb, w, b, *, compute_dtype=jnp.bfloat16):
    """x_nchw: [B, C, H, W] float32.
    wb: [feature_dim, C*H*W]  backbone linear weight (PyTorch layout)
    bb: [feature_dim]
    w : [num_classes, feature_dim]  nn.Linear weight (PyTorch layout)
    b : [num_classes]
    returns: [B, num_classes]
    """
    B = x_nchw.shape[0]
    in_dim = math.prod(x_nchw.shape[1:])
    feature_dim = wb.shape[0]
    num_classes = w.shape[0]
    assert wb.shape[1] == in_dim and w.shape[1] == feature_dim
    out_dtype = x_nchw.dtype
    out_itemsize = jnp.dtype(out_dtype).itemsize

    # ---- per-generation VMEM budget (v7x: 64 MiB phys; v5e/v6e: 128 MiB) ----
    try:
        vmem_phys = int(pltpu.get_tpu_info().vmem_capacity_bytes)
    except Exception:
        vmem_phys = 64 << 20                  # conservative fallback (v7x)
    vmem_budget = vmem_phys * 3 // 4          # headroom for Mosaic scratch

    # ---- batch tile: cap 256; prefer >=2 M tiles so the "parallel" batch
    #      axis can shard across v7x's two TensorCores ----
    B_pad = _round_up(B, 8)
    if B_pad <= 8:
        tb = B_pad
    else:
        tb = min(256, _round_up(-(-B_pad // 2), 8))
    B_pad = _round_up(B_pad, tb)

    C_pad = max(_round_up(num_classes, 128), 128)     # lane-dense output slab
    K128 = max(_round_up(in_dim, 128), 128)
    F128 = max(_round_up(feature_dim, 128), 128)

    # ---- pick (tf, tk): prefer a single F tile (kills head-W / x
    #      re-streaming), then the largest K tile under the VMEM budget ----
    tf_candidates = [F128] + [t for t in (2048, 1024, 512, 256, 128) if t < F128]
    tk_candidates = (2048, 1024, 512, 256, 128)
    tf, tk = 128, 128                                  # minimal fallback
    for tf_c in tf_candidates:
        picked = False
        for tk_c in tk_candidates:
            tk_c = min(tk_c, K128)
            if _vmem_tile_bytes(tb, tk_c, tf_c, C_pad, out_itemsize) <= vmem_budget:
                tf, tk = tf_c, tk_c
                picked = True
                break
        if picked:
            break

    K_pad = _round_up(K128, tk)
    F_pad = _round_up(F128, tf)

    # ---- wrapper-side layout plumbing (one-time; zero padding is inert) ----
    x_flat = x_nchw.reshape(B, in_dim).astype(compute_dtype)
    if (B_pad, K_pad) != (B, in_dim):
        x_flat = jnp.pad(x_flat, ((0, B_pad - B), (0, K_pad - in_dim)))

    # One-time transposes of the static parameters -> natural NN contraction
    # in the kernel (no per-tile XLU transpose feeding the MXU).
    wbt_p = wb.T.astype(compute_dtype)                 # [K, F]
    if (K_pad, F_pad) != (in_dim, feature_dim):
        wbt_p = jnp.pad(wbt_p, ((0, K_pad - in_dim), (0, F_pad - feature_dim)))
    bb_p = bb.astype(jnp.float32).reshape(1, feature_dim)
    if F_pad != feature_dim:
        bb_p = jnp.pad(bb_p, ((0, 0), (0, F_pad - feature_dim)))
    wt_p = w.T.astype(compute_dtype)                   # [F, C]
    if (F_pad, C_pad) != (feature_dim, num_classes):
        wt_p = jnp.pad(wt_p, ((0, F_pad - feature_dim), (0, C_pad - num_classes)))
    b_p = b.astype(jnp.float32).reshape(1, num_classes)
    if C_pad != num_classes:
        b_p = jnp.pad(b_p, ((0, 0), (0, C_pad - num_classes)))

    grid = (B_pad // tb, F_pad // tf, K_pad // tk)
    nm, nf, nk = grid

    flops = 2 * B_pad * K_pad * F_pad + 2 * B_pad * F_pad * C_pad
    # bytes_accessed accounts for re-streaming across tiles as currently tiled.
    bytes_accessed = (
        x_flat.size * x_flat.dtype.itemsize * nf
        + wbt_p.size * wbt_p.dtype.itemsize * nm
        + wt_p.size * wt_p.dtype.itemsize * nm
        + bb_p.size * 4 * nm
        + b_p.size * 4
        + B_pad * C_pad * out_itemsize)

    out_padded = pl.pallas_call(
        _fused_linear_kernel,
        out_shape=jax.ShapeDtypeStruct((B_pad, C_pad), out_dtype),
        grid_spec=pltpu.PrefetchScalarGridSpec(
            num_scalar_prefetch=0,
            grid=grid,
            in_specs=[
                pl.BlockSpec((tb, tk), lambda m, f, k: (m, k)),     # x
                pl.BlockSpec((tk, tf), lambda m, f, k: (k, f)),     # backbone W^T
                pl.BlockSpec((1, tf), lambda m, f, k: (0, f)),      # backbone bias
                pl.BlockSpec((tf, C_pad), lambda m, f, k: (f, 0)),  # head W^T
                pl.BlockSpec((1, C_pad), lambda m, f, k: (0, 0)),   # head bias
            ],
            out_specs=pl.BlockSpec((tb, C_pad), lambda m, f, k: (m, 0)),
            scratch_shapes=[
                pltpu.VMEM((tb, tf), jnp.float32),      # feature accumulator
                pltpu.VMEM((tb, C_pad), jnp.float32),   # output accumulator
            ],
        ),
        compiler_params=pltpu.CompilerParams(
            dimension_semantics=("parallel", "arbitrary", "arbitrary"),
            vmem_limit_bytes=int(vmem_budget),
        ),
        cost_estimate=pl.CostEstimate(
            flops=flops, transcendentals=0, bytes_accessed=int(bytes_accessed)),
    )(x_flat, wbt_p, bb_p, wt_p, b_p)

    return out_padded[:B, :num_classes]


if __name__ == "__main__":
    # Small shapes consistent with the forward pass:
    B, C, H, W = 2, 4, 16, 16          # input image, NCHW
    feature_dim = 128                   # backbone output dim
    num_classes = 16                    # nn.Linear head output

    key = jax.random.PRNGKey(0)
    kx, kwb, kbb, kw, kb = jax.random.split(key, 5)

    x = jax.random.normal(kx, (B, C, H, W), dtype=jnp.float32)

    in_dim = C * H * W
    # Deterministic "backbone" parameters (stand-in for an injected backbone).
    # TODO(synk): the backbone is an arbitrary injected nn.Module in the spec;
    # only a flatten+linear backbone is implemented here.
    wb = jax.random.normal(kwb, (feature_dim, in_dim), dtype=jnp.float32) * (1.0 / in_dim ** 0.5)
    bb = jax.random.normal(kbb, (feature_dim,), dtype=jnp.float32) * 0.01
    # nn.Linear(feature_dim, num_classes) parameters.
    w = jax.random.normal(kw, (num_classes, feature_dim), dtype=jnp.float32) * (1.0 / feature_dim ** 0.5)
    b = jax.random.normal(kb, (num_classes,), dtype=jnp.float32) * 0.01

    out = linear_model_forward(x, wb, bb, w, b)
    jax.block_until_ready(out)

    # Pure-JAX f32 reference (same math as the PyTorch forward).
    feat_ref = x.reshape(B, in_dim) @ wb.T + bb
    out_ref = feat_ref @ w.T + b
    assert out.shape == (B, num_classes)
    # bf16 inputs / f32 accumulation -> loosened tolerance vs. f32 reference.
    assert jnp.allclose(out, out_ref, atol=5e-2, rtol=5e-2), \
        float(jnp.max(jnp.abs(out - out_ref)))

    print("KERNEL_OK")
</pallas_src>

<mosaic_0001>
module attributes {stable_mosaic.version = 11 : i64} {
  func.func @_fused_linear_kernel(%arg0: i32, %arg1: i32, %arg2: i32, %arg3: memref<8x1024xbf16, #tpu.memory_space<vmem>>, %arg4: memref<1024x128xbf16, #tpu.memory_space<vmem>>, %arg5: memref<1x128xf32, #tpu.memory_space<vmem>>, %arg6: memref<128x128xbf16, #tpu.memory_space<vmem>>, %arg7: memref<1x128xf32, #tpu.memory_space<vmem>>, %arg8: memref<8x128xf32, #tpu.memory_space<vmem>>, %arg9: memref<8x128xf32, #tpu.memory_space<vmem>>, %arg10: memref<8x128xf32, #tpu.memory_space<vmem>>) attributes {dimension_semantics = [#tpu.dimension_semantics<parallel>, #tpu.dimension_semantics<arbitrary>, #tpu.dimension_semantics<arbitrary>], iteration_bounds = array<i64: 1, 1, 1>, scalar_prefetch = 0 : i64, scratch_operands = 2 : i64, tpu.core_type = #tpu.core_type<tc>, window_params = [{transform_indices = @transform_0, window_bounds = array<i64: 8, 1024>}, {transform_indices = @transform_1, window_bounds = array<i64: 1024, 128>}, {transform_indices = @transform_2, window_bounds = array<i64: 1, 128>}, {transform_indices = @transform_3, window_bounds = array<i64: 128, 128>}, {pipeline_mode = #tpu.pipeline_mode<synchronous>, transform_indices = @transform_4, window_bounds = array<i64: 1, 128>}, {transform_indices = @transform_5, window_bounds = array<i64: 8, 128>}]} {
    %c0_i32 = arith.constant 0 : i32
    %0 = arith.cmpi eq, %arg1, %c0_i32 : i32
    %c0_i32_0 = arith.constant 0 : i32
    %1 = arith.cmpi eq, %arg2, %c0_i32_0 : i32
    %2 = arith.andi %0, %1 : i1
    %3 = arith.extui %2 : i1 to i32
    %c0_i32_1 = arith.constant 0 : i32
    %4 = arith.cmpi ne, %3, %c0_i32_1 : i32
    scf.if %4 {
      %c0_16 = arith.constant 0 : index
      %c0_17 = arith.constant 0 : index
      %22 = vector.load %arg7[%c0_16, %c0_17] : memref<1x128xf32, #tpu.memory_space<vmem>>, vector<1x128xf32>
      %23 = vector.shape_cast %22 : vector<1x128xf32> to vector<1x128xf32>
      %24 = vector.broadcast %23 : vector<1x128xf32> to vector<8x128xf32>
      %c0_18 = arith.constant 0 : index
      %c0_19 = arith.constant 0 : index
      %25 = vector.load %arg10[%c0_18, %c0_19] : memref<8x128xf32, #tpu.memory_space<vmem>>, vector<8x128xf32>
      tpu.vector_store %arg10[%c0_18, %c0_19], %24 {strides = array<i32>} : memref<8x128xf32, #tpu.memory_space<vmem>>, vector<8x128xf32>,
    } else {
    }
    %c0_i32_2 = arith.constant 0 : i32
    %5 = arith.cmpi eq, %arg2, %c0_i32_2 : i32
    %6 = arith.extui %5 : i1 to i32
    %c0_i32_3 = arith.constant 0 : i32
    %7 = arith.cmpi ne, %6, %c0_i32_3 : i32
    scf.if %7 {
      %cst_16 = arith.constant 0.000000e+00 : f32
      %22 = vector.broadcast %cst_16 : f32 to vector<8x128xf32>
      %c0_17 = arith.constant 0 : index
      %c0_18 = arith.constant 0 : index
      %23 = vector.load %arg9[%c0_17, %c0_18] : memref<8x128xf32, #tpu.memory_space<vmem>>, vector<8x128xf32>
      tpu.vector_store %arg9[%c0_17, %c0_18], %22 {strides = array<i32>} : memref<8x128xf32, #tpu.memory_space<vmem>>, vector<8x128xf32>,
    } else {
    }
    %c0 = arith.constant 0 : index
    %c0_4 = arith.constant 0 : index
    %8 = vector.load %arg9[%c0, %c0_4] : memref<8x128xf32, #tpu.memory_space<vmem>>, vector<8x128xf32>
    %c0_5 = arith.constant 0 : index
    %c0_6 = arith.constant 0 : index
    %9 = vector.load %arg3[%c0_5, %c0_6] : memref<8x1024xbf16, #tpu.memory_space<vmem>>, vector<8x1024xbf16>
    %c0_7 = arith.constant 0 : index
    %c0_8 = arith.constant 0 : index
    %10 = vector.load %arg4[%c0_7, %c0_8] : memref<1024x128xbf16, #tpu.memory_space<vmem>>, vector<1024x128xbf16>
    %cst = arith.constant dense<0.000000e+00> : vector<8x128xf32>
    %11 = tpu.matmul %9, %10, %cst {dimension_numbers = #tpu.dot_dimension_numbers<[1], [0], [0], [1], [0, 0, 1, 1], [], []>} : vector<8x1024xbf16>, vector<1024x128xbf16>, vector<8x128xf32> -> vector<8x128xf32>
    %12 = arith.addf %8, %11 : vector<8x128xf32>
    %c0_9 = arith.constant 0 : index
    %c0_10 = arith.constant 0 : index
    %13 = vector.load %arg9[%c0_9, %c0_10] : memref<8x128xf32, #tpu.memory_space<vmem>>, vector<8x128xf32>
    tpu.vector_store %arg9[%c0_9, %c0_10], %12 {strides = array<i32>} : memref<8x128xf32, #tpu.memory_space<vmem>>, vector<8x128xf32>,
    %c0_i32_11 = arith.constant 0 : i32
    %14 = arith.cmpi eq, %arg2, %c0_i32_11 : i32
    %15 = arith.extui %14 : i1 to i32
    %c0_i32_12 = arith.constant 0 : i32
    %16 = arith.cmpi ne, %15, %c0_i32_12 : i32
    scf.if %16 {
      %c0_16 = arith.constant 0 : index
      %c0_17 = arith.constant 0 : index
      %22 = vector.load %arg9[%c0_16, %c0_17] : memref<8x128xf32, #tpu.memory_space<vmem>>, vector<8x128xf32>
      %c0_18 = arith.constant 0 : index
      %c0_19 = arith.constant 0 : index
      %23 = vector.load %arg5[%c0_18, %c0_19] : memref<1x128xf32, #tpu.memory_space<vmem>>, vector<1x128xf32>
      %24 = vector.broadcast %23 : vector<1x128xf32> to vector<8x128xf32>
      %25 = arith.addf %22, %24 : vector<8x128xf32>
      %26 = arith.truncf %25 : vector<8x128xf32> to vector<8x128xbf16>
      %c0_20 = arith.constant 0 : index
      %c0_21 = arith.constant 0 : index
      %27 = vector.load %arg10[%c0_20, %c0_21] : memref<8x128xf32, #tpu.memory_space<vmem>>, vector<8x128xf32>
      %c0_22 = arith.constant 0 : index
      %c0_23 = arith.constant 0 : index
      %28 = vector.load %arg6[%c0_22, %c0_23] : memref<128x128xbf16, #tpu.memory_space<vmem>>, vector<128x128xbf16>
      %cst_24 = arith.constant dense<0.000000e+00> : vector<8x128xf32>
      %29 = tpu.matmul %26, %28, %cst_24 {dimension_numbers = #tpu.dot_dimension_numbers<[1], [0], [0], [1], [0, 0, 1, 1], [], []>} : vector<8x128xbf16>, vector<128x128xbf16>, vector<8x128xf32> -> vector<8x128xf32>
      %30 = arith.addf %27, %29 : vector<8x128xf32>
      %c0_25 = arith.constant 0 : index
      %c0_26 = arith.constant 0 : index
      %31 = vector.load %arg10[%c0_25, %c0_26] : memref<8x128xf32, #tpu.memory_space<vmem>>, vector<8x128xf32>
      tpu.vector_store %arg10[%c0_25, %c0_26], %30 {strides = array<i32>} : memref<8x128xf32, #tpu.memory_space<vmem>>, vector<8x128xf32>,
    } else {
    }
    %c0_i32_13 = arith.constant 0 : i32
    %17 = arith.cmpi eq, %arg1, %c0_i32_13 : i32
    %c0_i32_14 = arith.constant 0 : i32
    %18 = arith.cmpi eq, %arg2, %c0_i32_14 : i32
    %19 = arith.andi %17, %18 : i1
    %20 = arith.extui %19 : i1 to i32
    %c0_i32_15 = arith.constant 0 : i32
    %21 = arith.cmpi ne, %20, %c0_i32_15 : i32
    scf.if %21 {
      %c0_16 = arith.constant 0 : index
      %c0_17 = arith.constant 0 : index
      %22 = vector.load %arg10[%c0_16, %c0_17] : memref<8x128xf32, #tpu.memory_space<vmem>>, vector<8x128xf32>
      %c0_18 = arith.constant 0 : index
      %c0_19 = arith.constant 0 : index
      %23 = vector.load %arg8[%c0_18, %c0_19] : memref<8x128xf32, #tpu.memory_space<vmem>>, vector<8x128xf32>
      tpu.vector_store %arg8[%c0_18, %c0_19], %22 {strides = array<i32>} : memref<8x128xf32, #tpu.memory_space<vmem>>, vector<8x128xf32>,
    } else {
    }
    return
  }
  func.func @transform_0(%arg0: i32, %arg1: i32, %arg2: i32) -> (i32, i32) {
    %c0_i32 = arith.constant 0 : i32
    return %arg0, %arg2 : i32, i32
  }
  func.func @transform_1(%arg0: i32, %arg1: i32, %arg2: i32) -> (i32, i32) {
    %c0_i32 = arith.constant 0 : i32
    return %arg2, %arg1 : i32, i32
  }
  func.func @transform_2(%arg0: i32, %arg1: i32, %arg2: i32) -> (i32, i32) {
    %c0_i32 = arith.constant 0 : i32
    %c0_i32_0 = arith.constant 0 : i32
    return %c0_i32, %arg1 : i32, i32
  }
  func.func @transform_3(%arg0: i32, %arg1: i32, %arg2: i32) -> (i32, i32) {
    %c0_i32 = arith.constant 0 : i32
    %c0_i32_0 = arith.constant 0 : i32
    return %arg1, %c0_i32 : i32, i32
  }
  func.func @transform_4(%arg0: i32, %arg1: i32, %arg2: i32) -> (i32, i32) {
    %c0_i32 = arith.constant 0 : i32
    %c0_i32_0 = arith.constant 0 : i32
    %c0_i32_1 = arith.constant 0 : i32
    return %c0_i32, %c0_i32_0 : i32, i32
  }
  func.func @transform_5(%arg0: i32, %arg1: i32, %arg2: i32) -> (i32, i32) {
    %c0_i32 = arith.constant 0 : i32
    %c0_i32_0 = arith.constant 0 : i32
    return %arg0, %c0_i32 : i32, i32
  }
}

</mosaic_0001>

<llo_original>
// kernel: tpu_custom_call.1
$region0: #{tpu_custom_call.1}
  #allocation0 [shape = 'u32[]', space=smem, size = 0x4, offset = 0x4, fixed_abs, tag = 'smem constant byte address 0x4 - core index']
  #allocation1 [shape = 'u32[144,128]{1,0:T(1,128)}', space=vmem, size = 0x12000, scoped, tag = 'internal scratch']
  #allocation2 [shape = 'f32[8,128]{1,0:T(8,128)}', space=vmem, size = 0x1000, scoped, tag = 'scratch operand']
  #allocation3 [shape = 'f32[8,128]{1,0:T(8,128)}', space=vmem, size = 0x1000, scoped, tag = 'scratch operand']
  %s0 = inlined_call_operand.hbm [shape: bf16[8,1024], index: 0, kind: input, shape index: {}]
  %s1 = inlined_call_operand.hbm [shape: bf16[1024,128], index: 1, kind: input, shape index: {}]
  %s2 = inlined_call_operand.vmem [shape: f32[1,128], index: 2, kind: input, shape index: {}]
  %s3 = inlined_call_operand.hbm [shape: bf16[128,128], index: 3, kind: input, shape index: {}]
  %s4 = inlined_call_operand.vmem [shape: f32[1,128], index: 4, kind: input, shape index: {}]
  %s5 = inlined_call_operand.hbm [shape: f32[8,128], index: 5, kind: output, shape index: {}]
  %s6 = sld [smem:[#allocation0]]
  $region58: #{tpu_custom_call.1} parent=0
    _
  %s8 = ssub.s32 1, %s6
  %s9 = scalar_select 0, %s8, %s6
  $region1: #{tpu_custom_call.1} parent=0
    #allocation4 [shape = 'u8[16384]{0}', space=vmem, size = 0x4000, scoped, tag = 'input window, operand 0, single buffered']
    #allocation5 [shape = 's32[1]{0}', space=sflag, size = 0x4, scoped, tag = 'scoped memory for tpu_custom_call.1']
    #allocation6 [shape = 's32[1]{0}', space=sflag, size = 0x4, scoped, tag = 'scoped memory for tpu_custom_call.1']
    #allocation7 [shape = 'u8[262144]{0}', space=vmem, size = 0x40000, scoped, tag = 'input window, operand 1, single buffered']
    #allocation8 [shape = 's32[1]{0}', space=sflag, size = 0x4, scoped, tag = 'scoped memory for tpu_custom_call.1']
    #allocation9 [shape = 'u8[32768]{0}', space=vmem, size = 0x8000, scoped, tag = 'input window, operand 3, single buffered']
    #allocation10 [shape = 'u8[4096]{0}', space=vmem, size = 0x1000, scoped, tag = 'output window, operand 0, single buffered']
    %10 = vsyncpa [#allocation5], 0
    %11 = vsyncpa [#allocation8], 0
    %12 = vsyncpa [#allocation6], 0
    // Predicated region
    $region2: #{tpu_custom_call.1} parent=1 // pred_check
      _
    $region3: #{tpu_custom_call.1} parent=1 // pred_check_branch
      %14 = sbr.rel (0) target = $region5
    $region4: #{tpu_custom_call.1} parent=1 // pred_region
      %s16 = ssub.s32 512, 512
      %17 = vsyncadd [#allocation5], %s16
      %s19 = sshll.u32 [#allocation4], 4
      %s20 = int_to_ptr.vmem [resolvable:$true] %s19
      %22 = dma.hbm_to_vmem [thread:$0]  %s0, 512, %s20, [#allocation5]
    $region5: #{tpu_custom_call.1} parent=1 // pred_fallthru
      _
    // Predicated region
    $region6: #{tpu_custom_call.1} parent=1 // pred_check
      _
    $region7: #{tpu_custom_call.1} parent=1 // pred_check_branch
      %24 = sbr.rel (0) target = $region9
    $region8: #{tpu_custom_call.1} parent=1 // pred_region
      %s26 = ssub.s32 8192, 8192
      %27 = vsyncadd [#allocation8], %s26
      %s28 = sshll.u32 [#allocation7], 4
      %s29 = int_to_ptr.vmem [resolvable:$true] %s28
      %34 = dma.hbm_to_vmem [thread:$0]  %s1, 8192, %s29, [#allocation8], 64, 64, 4
    $region9: #{tpu_custom_call.1} parent=1 // pred_fallthru
      _
    // Predicated region
    $region10: #{tpu_custom_call.1} parent=1 // pred_check
      _
    $region11: #{tpu_custom_call.1} parent=1 // pred_check_branch
      %36 = sbr.rel (0) target = $region13
    $region12: #{tpu_custom_call.1} parent=1 // pred_region
      _
    $region13: #{tpu_custom_call.1} parent=1 // pred_fallthru
      _
    // Predicated region
    $region14: #{tpu_custom_call.1} parent=1 // pred_check
      _
    $region15: #{tpu_custom_call.1} parent=1 // pred_check_branch
      %38 = sbr.rel (0) target = $region17
    $region16: #{tpu_custom_call.1} parent=1 // pred_region
      %s40 = ssub.s32 1024, 1024
      %41 = vsyncadd [#allocation8], %s40
      %s42 = sshll.u32 [#allocation9], 4
      %s43 = int_to_ptr.vmem [resolvable:$true] %s42
      %48 = dma.hbm_to_vmem [thread:$0]  %s3, 1024, %s43, [#allocation8], 64, 64, 4
    $region17: #{tpu_custom_call.1} parent=1 // pred_fallthru
      _
    // Predicated region
    $region18: #{tpu_custom_call.1} parent=1 // pred_check
      _
    $region19: #{tpu_custom_call.1} parent=1 // pred_check_branch
      %50 = sbr.rel (0) target = $region21
    $region20: #{tpu_custom_call.1} parent=1 // pred_region
      _
    $region21: #{tpu_custom_call.1} parent=1 // pred_fallthru
      _
    // Predicated region
    $region22: #{tpu_custom_call.1} parent=1 // pred_check
      _
    $region23: #{tpu_custom_call.1} parent=1 // pred_check_branch
      %52 = sbr.rel (0) target = $region25
    $region24: #{tpu_custom_call.1} parent=1 // pred_region
      %53 = dma.done [#allocation5], 512
    $region25: #{tpu_custom_call.1} parent=1 // pred_fallthru
      _
    // Predicated region
    $region26: #{tpu_custom_call.1} parent=1 // pred_check
      _
    $region27: #{tpu_custom_call.1} parent=1 // pred_check_branch
      %55 = sbr.rel (0) target = $region29
    $region28: #{tpu_custom_call.1} parent=1 // pred_region
      %56 = dma.done [#allocation8], 8192
    $region29: #{tpu_custom_call.1} parent=1 // pred_fallthru
      _
    // Predicated region
    $region30: #{tpu_custom_call.1} parent=1 // pred_check
      _
    $region31: #{tpu_custom_call.1} parent=1 // pred_check_branch
      %58 = sbr.rel (0) target = $region33
    $region32: #{tpu_custom_call.1} parent=1 // pred_region
      %59 = dma.done [#allocation8], 1024
    $region33: #{tpu_custom_call.1} parent=1 // pred_fallthru
      _
    %p61 = scmp.eq.s32.totalorder 0, 0
    %p62 = scmp.eq.s32.totalorder 0, 0
    %p63 = pnand %p61, %p62
    %p64 = pneg %p63
    // Predicated region
    $region34: #{tpu_custom_call.1} parent=1 // pred_check
      _
    $region35: #{tpu_custom_call.1} parent=1 // pred_check_branch
      %66 = sbr.rel (%p63) target = $region37
    $region36: #{tpu_custom_call.1} parent=1 // pred_region
      %v67 = vld [vmem:[%s4] sm:$0x1]
      %v69 = vlaneseq
      %v70 = vshrl.u32 %v69, 7
      %v71 = vsub.s32 0, %v70
      %v72 = vrot.slane %v67, %v71
      %74 = vst [vmem:[#allocation3] sm:$0xff] %v72
    $region37: #{tpu_custom_call.1} parent=1 // pred_fallthru
      _
    // Predicated region
    $region38: #{tpu_custom_call.1} parent=1 // pred_check
      %p75 = pneg %p62
    $region39: #{tpu_custom_call.1} parent=1 // pred_check_branch
      %77 = sbr.rel (%p75) target = $region41
    $region40: #{tpu_custom_call.1} parent=1 // pred_region
      %78 = vst [vmem:[#allocation2] sm:$0xff] 0.0
    $region41: #{tpu_custom_call.1} parent=1 // pred_fallthru
      _
    %v79 = vld [vmem:[#allocation2] sm:$0xff]
    %v80 = vld [vmem:[#allocation4] sm:$0xff]
    %v81 = vld [vmem:[#allocation4 + $0x8] sm:$0xff]
    %v82 = vld [vmem:[#allocation4 + $0x10] sm:$0xff]
    %v83 = vld [vmem:[#allocation4 + $0x18] sm:$0xff]
    %v84 = vld [vmem:[#allocation7] sm:$0xf]
    %v85 = vld [vmem:[#allocation7 + $0x4] sm:$0xf]
    %v86 = vld [vmem:[#allocation7 + $0x8] sm:$0xf]
    %v87 = vld [vmem:[#allocation7 + $0xc] sm:$0xf]
    %v88 = vld [vmem:[#allocation7 + $0x10] sm:$0xf]
    %v89 = vld [vmem:[#allocation7 + $0x14] sm:$0xf]
    %v90 = vld [vmem:[#allocation7 + $0x18] sm:$0xf]
    %v91 = vld [vmem:[#allocation7 + $0x1c] sm:$0xf]
    %v92 = vld [vmem:[#allocation7 + $0x20] sm:$0xf]
    %v93 = vld [vmem:[#allocation7 + $0x24] sm:$0xf]
    %v94 = vld [vmem:[#allocation7 + $0x28] sm:$0xf]
    %v95 = vld [vmem:[#allocation7 + $0x2c] sm:$0xf]
    %v96 = vld [vmem:[#allocation7 + $0x30] sm:$0xf]
    %v97 = vld [vmem:[#allocation7 + $0x34] sm:$0xf]
    %v98 = vld [vmem:[#allocation7 + $0x38] sm:$0xf]
    %v99 = vld [vmem:[#allocation7 + $0x3c] sm:$0xf]
    %v100 = vld [vmem:[#allocation7 + $0x40] sm:$0xf]
    %v101 = vld [vmem:[#allocation7 + $0x44] sm:$0xf]
    %v102 = vld [vmem:[#allocation7 + $0x48] sm:$0xf]
    %v103 = vld [vmem:[#allocation7 + $0x4c] sm:$0xf]
    %v104 = vld [vmem:[#allocation7 + $0x50] sm:$0xf]
    %v105 = vld [vmem:[#allocation7 + $0x54] sm:$0xf]
    %v106 = vld [vmem:[#allocation7 + $0x58] sm:$0xf]
    %v107 = vld [vmem:[#allocation7 + $0x5c] sm:$0xf]
    %v108 = vld [vmem:[#allocation7 + $0x60] sm:$0xf]
    %v109 = vld [vmem:[#allocation7 + $0x64] sm:$0xf]
    %v110 = vld [vmem:[#allocation7 + $0x68] sm:$0xf]
    %v111 = vld [vmem:[#allocation7 + $0x6c] sm:$0xf]
    %v112 = vld [vmem:[#allocation7 + $0x70] sm:$0xf]
    %v113 = vld [vmem:[#allocation7 + $0x74] sm:$0xf]
    %v114 = vld [vmem:[#allocation7 + $0x78] sm:$0xf]
    %v115 = vld [vmem:[#allocation7 + $0x7c] sm:$0xf]
    %v116 = vld [vmem:[#allocation7 + $0x80] sm:$0xf]
    %v117 = vld [vmem:[#allocation7 + $0x84] sm:$0xf]
    %v118 = vld [vmem:[#allocation7 + $0x88] sm:$0xf]
    %v119 = vld [vmem:[#allocation7 + $0x8c] sm:$0xf]
    %v120 = vld [vmem:[#allocation7 + $0x90] sm:$0xf]
    %v121 = vld [vmem:[#allocation7 + $0x94] sm:$0xf]
    %v122 = vld [vmem:[#allocation7 + $0x98] sm:$0xf]
    %v123 = vld [vmem:[#allocation7 + $0x9c] sm:$0xf]
    %v124 = vld [vmem:[#allocation7 + $0xa0] sm:$0xf]
    %v125 = vld [vmem:[#allocation7 + $0xa4] sm:$0xf]
    %v126 = vld [vmem:[#allocation7 + $0xa8] sm:$0xf]
    %v127 = vld [vmem:[#allocation7 + $0xac] sm:$0xf]
    %v128 = vld [vmem:[#allocation7 + $0xb0] sm:$0xf]
    %v129 = vld [vmem:[#allocation7 + $0xb4] sm:$0xf]
    %v130 = vld [vmem:[#allocation7 + $0xb8] sm:$0xf]
    %v131 = vld [vmem:[#allocation7 + $0xbc] sm:$0xf]
    %v132 = vld [vmem:[#allocation7 + $0xc0] sm:$0xf]
    %v133 = vld [vmem:[#allocation7 + $0xc4] sm:$0xf]
    %v134 = vld [vmem:[#allocation7 + $0xc8] sm:$0xf]
    %v135 = vld [vmem:[#allocation7 + $0xcc] sm:$0xf]
    %v136 = vld [vmem:[#allocation7 + $0xd0] sm:$0xf]
    %v137 = vld [vmem:[#allocation7 + $0xd4] sm:$0xf]
    %v138 = vld [vmem:[#allocation7 + $0xd8] sm:$0xf]
    %v139 = vld [vmem:[#allocation7 + $0xdc] sm:$0xf]
    %v140 = vld [vmem:[#allocation7 + $0xe0] sm:$0xf]
    %v141 = vld [vmem:[#allocation7 + $0xe4] sm:$0xf]
    %v142 = vld [vmem:[#allocation7 + $0xe8] sm:$0xf]
    %v143 = vld [vmem:[#allocation7 + $0xec] sm:$0xf]
    %v144 = vld [vmem:[#allocation7 + $0xf0] sm:$0xf]
    %v145 = vld [vmem:[#allocation7 + $0xf4] sm:$0xf]
    %v146 = vld [vmem:[#allocation7 + $0xf8] sm:$0xf]
    %v147 = vld [vmem:[#allocation7 + $0xfc] sm:$0xf]
    %v148 = vld [vmem:[#allocation7 + $0x100] sm:$0xf]
    %v149 = vld [vmem:[#allocation7 + $0x104] sm:$0xf]
    %v150 = vld [vmem:[#allocation7 + $0x108] sm:$0xf]
    %v151 = vld [vmem:[#allocation7 + $0x10c] sm:$0xf]
    %v152 = vld [vmem:[#allocation7 + $0x110] sm:$0xf]
    %v153 = vld [vmem:[#allocation7 + $0x114] sm:$0xf]
    %v154 = vld [vmem:[#allocation7 + $0x118] sm:$0xf]
    %v155 = vld [vmem:[#allocation7 + $0x11c] sm:$0xf]
    %v156 = vld [vmem:[#allocation7 + $0x120] sm:$0xf]
    %v157 = vld [vmem:[#allocation7 + $0x124] sm:$0xf]
    %v158 = vld [vmem:[#allocation7 + $0x128] sm:$0xf]
    %v159 = vld [vmem:[#allocation7 + $0x12c] sm:$0xf]
    %v160 = vld [vmem:[#allocation7 + $0x130] sm:$0xf]
    %v161 = vld [vmem:[#allocation7 + $0x134] sm:$0xf]
    %v162 = vld [vmem:[#allocation7 + $0x138] sm:$0xf]
    %v163 = vld [vmem:[#allocation7 + $0x13c] sm:$0xf]
    %v164 = vld [vmem:[#allocation7 + $0x140] sm:$0xf]
    %v165 = vld [vmem:[#allocation7 + $0x144] sm:$0xf]
    %v166 = vld [vmem:[#allocation7 + $0x148] sm:$0xf]
    %v167 = vld [vmem:[#allocation7 + $0x14c] sm:$0xf]
    %v168 = vld [vmem:[#allocation7 + $0x150] sm:$0xf]
    %v169 = vld [vmem:[#allocation7 + $0x154] sm:$0xf]
    %v170 = vld [vmem:[#allocation7 + $0x158] sm:$0xf]
    %v171 = vld [vmem:[#allocation7 + $0x15c] sm:$0xf]
    %v172 = vld [vmem:[#allocation7 + $0x160] sm:$0xf]
    %v173 = vld [vmem:[#allocation7 + $0x164] sm:$0xf]
    %v174 = vld [vmem:[#allocation7 + $0x168] sm:$0xf]
    %v175 = vld [vmem:[#allocation7 + $0x16c] sm:$0xf]
    %v176 = vld [vmem:[#allocation7 + $0x170] sm:$0xf]
    %v177 = vld [vmem:[#allocation7 + $0x174] sm:$0xf]
    %v178 = vld [vmem:[#allocation7 + $0x178] sm:$0xf]
    %v179 = vld [vmem:[#allocation7 + $0x17c] sm:$0xf]
    %v180 = vld [vmem:[#allocation7 + $0x180] sm:$0xf]
    %v181 = vld [vmem:[#allocation7 + $0x184] sm:$0xf]
    %v182 = vld [vmem:[#allocation7 + $0x188] sm:$0xf]
    %v183 = vld [vmem:[#allocation7 + $0x18c] sm:$0xf]
    %v184 = vld [vmem:[#allocation7 + $0x190] sm:$0xf]
    %v185 = vld [vmem:[#allocation7 + $0x194] sm:$0xf]
    %v186 = vld [vmem:[#allocation7 + $0x198] sm:$0xf]
    %v187 = vld [vmem:[#allocation7 + $0x19c] sm:$0xf]
    %v188 = vld [vmem:[#allocation7 + $0x1a0] sm:$0xf]
    %v189 = vld [vmem:[#allocation7 + $0x1a4] sm:$0xf]
    %v190 = vld [vmem:[#allocation7 + $0x1a8] sm:$0xf]
    %v191 = vld [vmem:[#allocation7 + $0x1ac] sm:$0xf]
    %v192 = vld [vmem:[#allocation7 + $0x1b0] sm:$0xf]
    %v193 = vld [vmem:[#allocation7 + $0x1b4] sm:$0xf]
    %v194 = vld [vmem:[#allocation7 + $0x1b8] sm:$0xf]
    %v195 = vld [vmem:[#allocation7 + $0x1bc] sm:$0xf]
    %v196 = vld [vmem:[#allocation7 + $0x1c0] sm:$0xf]
    %v197 = vld [vmem:[#allocation7 + $0x1c4] sm:$0xf]
    %v198 = vld [vmem:[#allocation7 + $0x1c8] sm:$0xf]
    %v199 = vld [vmem:[#allocation7 + $0x1cc] sm:$0xf]
    %v200 = vld [vmem:[#allocation7 + $0x1d0] sm:$0xf]
    %v201 = vld [vmem:[#allocation7 + $0x1d4] sm:$0xf]
    %v202 = vld [vmem:[#allocation7 + $0x1d8] sm:$0xf]
    %v203 = vld [vmem:[#allocation7 + $0x1dc] sm:$0xf]
    %v204 = vld [vmem:[#allocation7 + $0x1e0] sm:$0xf]
    %v205 = vld [vmem:[#allocation7 + $0x1e4] sm:$0xf]
    %v206 = vld [vmem:[#allocation7 + $0x1e8] sm:$0xf]
    %v207 = vld [vmem:[#allocation7 + $0x1ec] sm:$0xf]
    %v208 = vld [vmem:[#allocation7 + $0x1f0] sm:$0xf]
    %v209 = vld [vmem:[#allocation7 + $0x1f4] sm:$0xf]
    %v210 = vld [vmem:[#allocation7 + $0x1f8] sm:$0xf]
    %v211 = vld [vmem:[#allocation7 + $0x1fc] sm:$0xf]
    %v216 = vunpack.c.l.b16 %v80
    %v217 = vunpack.c.h.b16 %v80
    %v218 = vunpack.c.l.b16 %v81
    %v219 = vunpack.c.h.b16 %v81
    %v220 = vunpack.c.l.b16 %v82
    %v221 = vunpack.c.h.b16 %v82
    %v222 = vunpack.c.l.b16 %v83
    %v223 = vunpack.c.h.b16 %v83
    %v224 = vpack.c.b16 %v216, %v216
    %v225 = vpack.c.b16 %v217, %v217
    %v226 = vpack.c.b16 %v218, %v218
    %v227 = vpack.c.b16 %v219, %v219
    %v228 = vpack.c.b16 %v220, %v220
    %v229 = vpack.c.b16 %v221, %v221
    %v230 = vpack.c.b16 %v222, %v222
    %v231 = vpack.c.b16 %v223, %v223
    %v368 = vunpack.c.l.b16 %v84
    %v369 = vunpack.c.l.b16 %v85
    %v370 = vunpack.c.l.b16 %v86
    %v371 = vunpack.c.l.b16 %v87
    %v372 = vunpack.c.l.b16 %v88
    %v373 = vunpack.c.l.b16 %v89
    %v374 = vunpack.c.l.b16 %v90
    %v375 = vunpack.c.l.b16 %v91
    %v376 = vunpack.c.l.b16 %v92
    %v377 = vunpack.c.l.b16 %v93
    %v378 = vunpack.c.l.b16 %v94
    %v379 = vunpack.c.l.b16 %v95
    %v380 = vunpack.c.l.b16 %v96
    %v381 = vunpack.c.l.b16 %v97
    %v382 = vunpack.c.l.b16 %v98
    %v383 = vunpack.c.l.b16 %v99
    %v384 = vunpack.c.l.b16 %v100
    %v385 = vunpack.c.l.b16 %v101
    %v386 = vunpack.c.l.b16 %v102
    %v387 = vunpack.c.l.b16 %v103
    %v388 = vunpack.c.l.b16 %v104
    %v389 = vunpack.c.l.b16 %v105
    %v390 = vunpack.c.l.b16 %v106
    %v391 = vunpack.c.l.b16 %v107
    %v392 = vunpack.c.l.b16 %v108
    %v393 = vunpack.c.l.b16 %v109
    %v394 = vunpack.c.l.b16 %v110
    %v395 = vunpack.c.l.b16 %v111
    %v396 = vunpack.c.l.b16 %v112
    %v397 = vunpack.c.l.b16 %v113
    %v398 = vunpack.c.l.b16 %v114
    %v399 = vunpack.c.l.b16 %v115
    %v400 = vunpack.c.l.b16 %v116
    %v401 = vunpack.c.l.b16 %v117
    %v402 = vunpack.c.l.b16 %v118
    %v403 = vunpack.c.l.b16 %v119
    %v404 = vunpack.c.l.b16 %v120
    %v405 = vunpack.c.l.b16 %v121
    %v406 = vunpack.c.l.b16 %v122
    %v407 = vunpack.c.l.b16 %v123
    %v408 = vunpack.c.l.b16 %v124
    %v409 = vunpack.c.l.b16 %v125
    %v410 = vunpack.c.l.b16 %v126
    %v411 = vunpack.c.l.b16 %v127
    %v412 = vunpack.c.l.b16 %v128
    %v413 = vunpack.c.l.b16 %v129
    %v414 = vunpack.c.l.b16 %v130
    %v415 = vunpack.c.l.b16 %v131
    %v416 = vunpack.c.l.b16 %v132
    %v417 = vunpack.c.l.b16 %v133
    %v418 = vunpack.c.l.b16 %v134
    %v419 = vunpack.c.l.b16 %v135
    %v420 = vunpack.c.l.b16 %v136
    %v421 = vunpack.c.l.b16 %v137
    %v422 = vunpack.c.l.b16 %v138
    %v423 = vunpack.c.l.b16 %v139
    %v424 = vunpack.c.l.b16 %v140
    %v425 = vunpack.c.l.b16 %v141
    %v426 = vunpack.c.l.b16 %v142
    %v427 = vunpack.c.l.b16 %v143
    %v428 = vunpack.c.l.b16 %v144
    %v429 = vunpack.c.l.b16 %v145
    %v430 = vunpack.c.l.b16 %v146
    %v431 = vunpack.c.l.b16 %v147
    %v432 = vunpack.c.l.b16 %v148
    %v433 = vunpack.c.l.b16 %v149
    %v434 = vunpack.c.l.b16 %v150
    %v435 = vunpack.c.l.b16 %v151
    %v436 = vunpack.c.l.b16 %v152
    %v437 = vunpack.c.l.b16 %v153
    %v438 = vunpack.c.l.b16 %v154
    %v439 = vunpack.c.l.b16 %v155
    %v440 = vunpack.c.l.b16 %v156
    %v441 = vunpack.c.l.b16 %v157
    %v442 = vunpack.c.l.b16 %v158
    %v443 = vunpack.c.l.b16 %v159
    %v444 = vunpack.c.l.b16 %v160
    %v445 = vunpack.c.l.b16 %v161
    %v446 = vunpack.c.l.b16 %v162
    %v447 = vunpack.c.l.b16 %v163
    %v448 = vunpack.c.l.b16 %v164
    %v449 = vunpack.c.l.b16 %v165
    %v450 = vunpack.c.l.b16 %v166
    %v451 = vunpack.c.l.b16 %v167
    %v452 = vunpack.c.l.b16 %v168
    %v453 = vunpack.c.l.b16 %v169
    %v454 = vunpack.c.l.b16 %v170
    %v455 = vunpack.c.l.b16 %v171
    %v456 = vunpack.c.l.b16 %v172
    %v457 = vunpack.c.l.b16 %v173
    %v458 = vunpack.c.l.b16 %v174
    %v459 = vunpack.c.l.b16 %v175
    %v460 = vunpack.c.l.b16 %v176
    %v461 = vunpack.c.l.b16 %v177
    %v462 = vunpack.c.l.b16 %v178
    %v463 = vunpack.c.l.b16 %v179
    %v464 = vunpack.c.l.b16 %v180
    %v465 = vunpack.c.l.b16 %v181
    %v466 = vunpack.c.l.b16 %v182
    %v467 = vunpack.c.l.b16 %v183
    %v468 = vunpack.c.l.b16 %v184
    %v469 = vunpack.c.l.b16 %v185
    %v470 = vunpack.c.l.b16 %v186
    %v471 = vunpack.c.l.b16 %v187
    %v472 = vunpack.c.l.b16 %v188
    %v473 = vunpack.c.l.b16 %v189
    %v474 = vunpack.c.l.b16 %v190
    %v475 = vunpack.c.l.b16 %v191
    %v476 = vunpack.c.l.b16 %v192
    %v477 = vunpack.c.l.b16 %v193
    %v478 = vunpack.c.l.b16 %v194
    %v479 = vunpack.c.l.b16 %v195
    %v480 = vunpack.c.l.b16 %v196
    %v481 = vunpack.c.l.b16 %v197
    %v482 = vunpack.c.l.b16 %v198
    %v483 = vunpack.c.l.b16 %v199
    %v484 = vunpack.c.l.b16 %v200
    %v485 = vunpack.c.l.b16 %v201
    %v486 = vunpack.c.l.b16 %v202
    %v487 = vunpack.c.l.b16 %v203
    %v488 = vunpack.c.l.b16 %v204
    %v489 = vunpack.c.l.b16 %v205
    %v490 = vunpack.c.l.b16 %v206
    %v491 = vunpack.c.l.b16 %v207
    %v492 = vunpack.c.l.b16 %v208
    %v493 = vunpack.c.l.b16 %v209
    %v494 = vunpack.c.l.b16 %v210
    %v495 = vunpack.c.l.b16 %v211
    %v496 = vpack.c.b16 %v369, %v368
    %v497 = vpack.c.b16 %v371, %v370
    %v498 = vpack.c.b16 %v373, %v372
    %v499 = vpack.c.b16 %v375, %v374
    %v500 = vpack.c.b16 %v377, %v376
    %v501 = vpack.c.b16 %v379, %v378
    %v502 = vpack.c.b16 %v381, %v380
    %v503 = vpack.c.b16 %v383, %v382
    %v504 = vpack.c.b16 %v385, %v384
    %v505 = vpack.c.b16 %v387, %v386
    %v506 = vpack.c.b16 %v389, %v388
    %v507 = vpack.c.b16 %v391, %v390
    %v508 = vpack.c.b16 %v393, %v392
    %v509 = vpack.c.b16 %v395, %v394
    %v510 = vpack.c.b16 %v397, %v396
    %v511 = vpack.c.b16 %v399, %v398
    %v512 = vpack.c.b16 %v401, %v400
    %v513 = vpack.c.b16 %v403, %v402
    %v514 = vpack.c.b16 %v405, %v404
    %v515 = vpack.c.b16 %v407, %v406
    %v516 = vpack.c.b16 %v409, %v408
    %v517 = vpack.c.b16 %v411, %v410
    %v518 = vpack.c.b16 %v413, %v412
    %v519 = vpack.c.b16 %v415, %v414
    %v520 = vpack.c.b16 %v417, %v416
    %v521 = vpack.c.b16 %v419, %v418
    %v522 = vpack.c.b16 %v421, %v420
    %v523 = vpack.c.b16 %v423, %v422
    %v524 = vpack.c.b16 %v425, %v424
    %v525 = vpack.c.b16 %v427, %v426
    %v526 = vpack.c.b16 %v429, %v428
    %v527 = vpack.c.b16 %v431, %v430
    %v528 = vpack.c.b16 %v433, %v432
    %v529 = vpack.c.b16 %v435, %v434
    %v530 = vpack.c.b16 %v437, %v436
    %v531 = vpack.c.b16 %v439, %v438
    %v532 = vpack.c.b16 %v441, %v440
    %v533 = vpack.c.b16 %v443, %v442
    %v534 = vpack.c.b16 %v445, %v444
    %v535 = vpack.c.b16 %v447, %v446
    %v536 = vpack.c.b16 %v449, %v448
    %v537 = vpack.c.b16 %v451, %v450
    %v538 = vpack.c.b16 %v453, %v452
    %v539 = vpack.c.b16 %v455, %v454
    %v540 = vpack.c.b16 %v457, %v456
    %v541 = vpack.c.b16 %v459, %v458
    %v542 = vpack.c.b16 %v461, %v460
    %v543 = vpack.c.b16 %v463, %v462
    %v544 = vpack.c.b16 %v465, %v464
    %v545 = vpack.c.b16 %v467, %v466
    %v546 = vpack.c.b16 %v469, %v468
    %v547 = vpack.c.b16 %v471, %v470
    %v548 = vpack.c.b16 %v473, %v472
    %v549 = vpack.c.b16 %v475, %v474
    %v550 = vpack.c.b16 %v477, %v476
    %v551 = vpack.c.b16 %v479, %v478
    %v552 = vpack.c.b16 %v481, %v480
    %v553 = vpack.c.b16 %v483, %v482
    %v554 = vpack.c.b16 %v485, %v484
    %v555 = vpack.c.b16 %v487, %v486
    %v556 = vpack.c.b16 %v489, %v488
    %v557 = vpack.c.b16 %v491, %v490
    %v558 = vpack.c.b16 %v493, %v492
    %v559 = vpack.c.b16 %v495, %v494
    %624 = vmatprep.subr.bf16.mxu0 0
    %625 = vmatpush1.bf16.msra.mxu0 %v496
    %626 = vmatprep.subr.bf16.mxu0 0
    %627 = vmatpush1.bf16.msra.mxu0 %v497
    %628 = vmatprep.subr.bf16.mxu0 0
    %629 = vmatpush1.bf16.msra.mxu0 %v498
    %630 = vmatprep.subr.bf16.mxu0 0
    %631 = vmatpush1.bf16.msra.mxu0 %v499
    %632 = vmatprep.subr.bf16.mxu0 0
    %633 = vmatpush1.bf16.msra.mxu0 %v500
    %634 = vmatprep.subr.bf16.mxu0 0
    %635 = vmatpush1.bf16.msra.mxu0 %v501
    %636 = vmatprep.subr.bf16.mxu0 0
    %637 = vmatpush1.bf16.msra.mxu0 %v502
    %638 = vmatprep.subr.bf16.mxu0 0
    %639 = vmatpush1.bf16.msra.mxu0 %v503
    %640 = vmatprep.subr.bf16.mxu0 0
    %641 = vmatpush1.bf16.msra.mxu0 %v504
    %642 = vmatprep.subr.bf16.mxu0 0
    %643 = vmatpush1.bf16.msra.mxu0 %v505
    %644 = vmatprep.subr.bf16.mxu0 0
    %645 = vmatpush1.bf16.msra.mxu0 %v506
    %646 = vmatprep.subr.bf16.mxu0 0
    %647 = vmatpush1.bf16.msra.mxu0 %v507
    %648 = vmatprep.subr.bf16.mxu0 0
    %649 = vmatpush1.bf16.msra.mxu0 %v508
    %650 = vmatprep.subr.bf16.mxu0 0
    %651 = vmatpush1.bf16.msra.mxu0 %v509
    %652 = vmatprep.subr.bf16.mxu0 0
    %653 = vmatpush1.bf16.msra.mxu0 %v510
    %654 = vmatprep.subr.bf16.mxu0 0
    %655 = vmatpush1.bf16.msra.mxu0 %v511
    %656 = vmatprep.mubr.bf16.mxu0 %v225
    %657 = vmatmul.mubr.bf16.gmra.mrb[0].mxu0 %v224
    %v658 = vpop.f32.mrb[0].mxu0
    %v659 = vadd.f32 0.0, %v658
    %v660 = vpop.f32.mrb[0].mxu0
    %v661 = vpop.f32.mrb[0].mxu0
    %v662 = vpop.f32.mrb[0].mxu0
    %663 = vdwg.mxu0
    %664 = vmatprep.subr.bf16.mxu0 0
    %665 = vmatpush1.bf16.msra.mxu0 %v512
    %666 = vmatprep.subr.bf16.mxu0 0
    %667 = vmatpush1.bf16.msra.mxu0 %v513
    %668 = vmatprep.subr.bf16.mxu0 0
    %669 = vmatpush1.bf16.msra.mxu0 %v514
    %670 = vmatprep.subr.bf16.mxu0 0
    %671 = vmatpush1.bf16.msra.mxu0 %v515
    %672 = vmatprep.subr.bf16.mxu0 0
    %673 = vmatpush1.bf16.msra.mxu0 %v516
    %674 = vmatprep.subr.bf16.mxu0 0
    %675 = vmatpush1.bf16.msra.mxu0 %v517
    %676 = vmatprep.subr.bf16.mxu0 0
    %677 = vmatpush1.bf16.msra.mxu0 %v518
    %678 = vmatprep.subr.bf16.mxu0 0
    %679 = vmatpush1.bf16.msra.mxu0 %v519
    %680 = vmatprep.subr.bf16.mxu0 0
    %681 = vmatpush1.bf16.msra.mxu0 %v520
    %682 = vmatprep.subr.bf16.mxu0 0
    %683 = vmatpush1.bf16.msra.mxu0 %v521
    %684 = vmatprep.subr.bf16.mxu0 0
    %685 = vmatpush1.bf16.msra.mxu0 %v522
    %686 = vmatprep.subr.bf16.mxu0 0
    %687 = vmatpush1.bf16.msra.mxu0 %v523
    %688 = vmatprep.subr.bf16.mxu0 0
    %689 = vmatpush1.bf16.msra.mxu0 %v524
    %690 = vmatprep.subr.bf16.mxu0 0
    %691 = vmatpush1.bf16.msra.mxu0 %v525
    %692 = vmatprep.subr.bf16.mxu0 0
    %693 = vmatpush1.bf16.msra.mxu0 %v526
    %694 = vmatprep.subr.bf16.mxu0 0
    %695 = vmatpush1.bf16.msra.mxu0 %v527
    %696 = vmatprep.mubr.bf16.mxu0 %v227
    %697 = vmatmul.mubr.bf16.gmra.mrb[0].mxu0 %v226
    %v698 = vpop.f32.mrb[0].mxu0
    %v699 = vadd.f32 %v659, %v698
    %v700 = vpop.f32.mrb[0].mxu0
    %v701 = vpop.f32.mrb[0].mxu0
    %v702 = vpop.f32.mrb[0].mxu0
    %703 = vdwg.mxu0
    %704 = vmatprep.subr.bf16.mxu0 0
    %705 = vmatpush1.bf16.msra.mxu0 %v528
    %706 = vmatprep.subr.bf16.mxu0 0
    %707 = vmatpush1.bf16.msra.mxu0 %v529
    %708 = vmatprep.subr.bf16.mxu0 0
    %709 = vmatpush1.bf16.msra.mxu0 %v530
    %710 = vmatprep.subr.bf16.mxu0 0
    %711 = vmatpush1.bf16.msra.mxu0 %v531
    %712 = vmatprep.subr.bf16.mxu0 0
    %713 = vmatpush1.bf16.msra.mxu0 %v532
    %714 = vmatprep.subr.bf16.mxu0 0
    %715 = vmatpush1.bf16.msra.mxu0 %v533
    %716 = vmatprep.subr.bf16.mxu0 0
    %717 = vmatpush1.bf16.msra.mxu0 %v534
    %718 = vmatprep.subr.bf16.mxu0 0
    %719 = vmatpush1.bf16.msra.mxu0 %v535
    %720 = vmatprep.subr.bf16.mxu0 0
    %721 = vmatpush1.bf16.msra.mxu0 %v536
    %722 = vmatprep.subr.bf16.mxu0 0
    %723 = vmatpush1.bf16.msra.mxu0 %v537
    %724 = vmatprep.subr.bf16.mxu0 0
    %725 = vmatpush1.bf16.msra.mxu0 %v538
    %726 = vmatprep.subr.bf16.mxu0 0
    %727 = vmatpush1.bf16.msra.mxu0 %v539
    %728 = vmatprep.subr.bf16.mxu0 0
    %729 = vmatpush1.bf16.msra.mxu0 %v540
    %730 = vmatprep.subr.bf16.mxu0 0
    %731 = vmatpush1.bf16.msra.mxu0 %v541
    %732 = vmatprep.subr.bf16.mxu0 0
    %733 = vmatpush1.bf16.msra.mxu0 %v542
    %734 = vmatprep.subr.bf16.mxu0 0
    %735 = vmatpush1.bf16.msra.mxu0 %v543
    %736 = vmatprep.mubr.bf16.mxu0 %v229
    %737 = vmatmul.mubr.bf16.gmra.mrb[0].mxu0 %v228
    %v738 = vpop.f32.mrb[0].mxu0
    %v739 = vadd.f32 %v699, %v738
    %v740 = vpop.f32.mrb[0].mxu0
    %v741 = vpop.f32.mrb[0].mxu0
    %v742 = vpop.f32.mrb[0].mxu0
    %743 = vdwg.mxu0
    %744 = vmatprep.subr.bf16.mxu0 0
    %745 = vmatpush1.bf16.msra.mxu0 %v544
    %746 = vmatprep.subr.bf16.mxu0 0
    %747 = vmatpush1.bf16.msra.mxu0 %v545
    %748 = vmatprep.subr.bf16.mxu0 0
    %749 = vmatpush1.bf16.msra.mxu0 %v546
    %750 = vmatprep.subr.bf16.mxu0 0
    %751 = vmatpush1.bf16.msra.mxu0 %v547
    %752 = vmatprep.subr.bf16.mxu0 0
    %753 = vmatpush1.bf16.msra.mxu0 %v548
    %754 = vmatprep.subr.bf16.mxu0 0
    %755 = vmatpush1.bf16.msra.mxu0 %v549
    %756 = vmatprep.subr.bf16.mxu0 0
    %757 = vmatpush1.bf16.msra.mxu0 %v550
    %758 = vmatprep.subr.bf16.mxu0 0
    %759 = vmatpush1.bf16.msra.mxu0 %v551
    %760 = vmatprep.subr.bf16.mxu0 0
    %761 = vmatpush1.bf16.msra.mxu0 %v552
    %762 = vmatprep.subr.bf16.mxu0 0
    %763 = vmatpush1.bf16.msra.mxu0 %v553
    %764 = vmatprep.subr.bf16.mxu0 0
    %765 = vmatpush1.bf16.msra.mxu0 %v554
    %766 = vmatprep.subr.bf16.mxu0 0
    %767 = vmatpush1.bf16.msra.mxu0 %v555
    %768 = vmatprep.subr.bf16.mxu0 0
    %769 = vmatpush1.bf16.msra.mxu0 %v556
    %770 = vmatprep.subr.bf16.mxu0 0
    %771 = vmatpush1.bf16.msra.mxu0 %v557
    %772 = vmatprep.subr.bf16.mxu0 0
    %773 = vmatpush1.bf16.msra.mxu0 %v558
    %774 = vmatprep.subr.bf16.mxu0 0
    %775 = vmatpush1.bf16.msra.mxu0 %v559
    %776 = vmatprep.mubr.bf16.mxu0 %v231
    %777 = vmatmul.mubr.bf16.gmra.mrb[0].mxu0 %v230
    %v778 = vpop.f32.mrb[0].mxu0
    %v779 = vadd.f32 %v739, %v778
    %v780 = vpop.f32.mrb[0].mxu0
    %v781 = vpop.f32.mrb[0].mxu0
    %v782 = vpop.f32.mrb[0].mxu0
    %783 = vdwg.mxu0
    %v784 = vadd.f32 %v79, %v779
    %785 = vst [vmem:[#allocation2] sm:$0xff] %v784
    // Predicated region
    $region42: #{tpu_custom_call.1} parent=1 // pred_check
      %p786 = pneg %p62
    $region43: #{tpu_custom_call.1} parent=1 // pred_check_branch
      %788 = sbr.rel (%p786) target = $region45
    $region44: #{tpu_custom_call.1} parent=1 // pred_region
      %v789 = vld [vmem:[#allocation2] sm:$0xff]
      %v790 = vld [vmem:[%s2] sm:$0x1]
      %v792 = vlaneseq
      %v793 = vshrl.u32 %v792, 7
      %v794 = vsub.s32 0, %v793
      %v795 = vrot.slane %v790, %v794
      %v797 = vadd.f32 %v789, %v795
      %v798 = vpack.c.bf16 %v797, %v797
      %v799 = vld [vmem:[#allocation3] sm:$0xff]
      %v800 = vld [vmem:[#allocation9] sm:$0xf]
      %v801 = vld [vmem:[#allocation9 + $0x4] sm:$0xf]
      %v802 = vld [vmem:[#allocation9 + $0x8] sm:$0xf]
      %v803 = vld [vmem:[#allocation9 + $0xc] sm:$0xf]
      %v804 = vld [vmem:[#allocation9 + $0x10] sm:$0xf]
      %v805 = vld [vmem:[#allocation9 + $0x14] sm:$0xf]
      %v806 = vld [vmem:[#allocation9 + $0x18] sm:$0xf]
      %v807 = vld [vmem:[#allocation9 + $0x1c] sm:$0xf]
      %v808 = vld [vmem:[#allocation9 + $0x20] sm:$0xf]
      %v809 = vld [vmem:[#allocation9 + $0x24] sm:$0xf]
      %v810 = vld [vmem:[#allocation9 + $0x28] sm:$0xf]
      %v811 = vld [vmem:[#allocation9 + $0x2c] sm:$0xf]
      %v812 = vld [vmem:[#allocation9 + $0x30] sm:$0xf]
      %v813 = vld [vmem:[#allocation9 + $0x34] sm:$0xf]
      %v814 = vld [vmem:[#allocation9 + $0x38] sm:$0xf]
      %v815 = vld [vmem:[#allocation9 + $0x3c] sm:$0xf]
      %v832 = vunpack.c.l.b16 %v800
      %v833 = vunpack.c.l.b16 %v801
      %v834 = vunpack.c.l.b16 %v802
      %v835 = vunpack.c.l.b16 %v803
      %v836 = vunpack.c.l.b16 %v804
      %v837 = vunpack.c.l.b16 %v805
      %v838 = vunpack.c.l.b16 %v806
      %v839 = vunpack.c.l.b16 %v807
      %v840 = vunpack.c.l.b16 %v808
      %v841 = vunpack.c.l.b16 %v809
      %v842 = vunpack.c.l.b16 %v810
      %v843 = vunpack.c.l.b16 %v811
      %v844 = vunpack.c.l.b16 %v812
      %v845 = vunpack.c.l.b16 %v813
      %v846 = vunpack.c.l.b16 %v814
      %v847 = vunpack.c.l.b16 %v815
      %v848 = vpack.c.b16 %v833, %v832
      %v849 = vpack.c.b16 %v835, %v834
      %v850 = vpack.c.b16 %v837, %v836
      %v851 = vpack.c.b16 %v839, %v838
      %v852 = vpack.c.b16 %v841, %v840
      %v853 = vpack.c.b16 %v843, %v842
      %v854 = vpack.c.b16 %v845, %v844
      %v855 = vpack.c.b16 %v847, %v846
      %864 = vmatprep.subr.bf16.mxu0 0
      %865 = vmatpush1.bf16.msra.mxu0 %v848
      %866 = vmatprep.subr.bf16.mxu0 0
      %867 = vmatpush1.bf16.msra.mxu0 %v849
      %868 = vmatprep.subr.bf16.mxu0 0
      %869 = vmatpush1.bf16.msra.mxu0 %v850
      %870 = vmatprep.subr.bf16.mxu0 0
      %871 = vmatpush1.bf16.msra.mxu0 %v851
      %872 = vmatprep.subr.bf16.mxu0 0
      %873 = vmatpush1.bf16.msra.mxu0 %v852
      %874 = vmatprep.subr.bf16.mxu0 0
      %875 = vmatpush1.bf16.msra.mxu0 %v853
      %876 = vmatprep.subr.bf16.mxu0 0
      %877 = vmatpush1.bf16.msra.mxu0 %v854
      %878 = vmatprep.subr.bf16.mxu0 0
      %879 = vmatpush1.bf16.msra.mxu0 %v855
      %880 = vmatprep.subr.bf16.mxu0 0
      %881 = vmatpush1.bf16.msra.mxu0 0
      %882 = vmatprep.subr.bf16.mxu0 0
      %883 = vmatpush1.bf16.msra.mxu0 0
      %884 = vmatprep.subr.bf16.mxu0 0
      %885 = vmatpush1.bf16.msra.mxu0 0
      %886 = vmatprep.subr.bf16.mxu0 0
      %887 = vmatpush1.bf16.msra.mxu0 0
      %888 = vmatprep.subr.bf16.mxu0 0
      %889 = vmatpush1.bf16.msra.mxu0 0
      %890 = vmatprep.subr.bf16.mxu0 0
      %891 = vmatpush1.bf16.msra.mxu0 0
      %892 = vmatprep.subr.bf16.mxu0 0
      %893 = vmatpush1.bf16.msra.mxu0 0
      %894 = vmatprep.subr.bf16.mxu0 0
      %895 = vmatpush1.bf16.msra.mxu0 0
      %896 = vmatprep.mubr.bf16.mxu0 0
      %897 = vmatmul.mubr.bf16.gmra.mrb[0].mxu0 %v798
      %v898 = vpop.f32.mrb[0].mxu0
      %v899 = vadd.f32 0.0, %v898
      %v900 = vpop.f32.mrb[0].mxu0
      %v901 = vpop.f32.mrb[0].mxu0
      %v902 = vpop.f32.mrb[0].mxu0
      %903 = vdwg.mxu0
      %v904 = vadd.f32 %v799, %v899
      %905 = vst [vmem:[#allocation3] sm:$0xff] %v904
    $region45: #{tpu_custom_call.1} parent=1 // pred_fallthru
      _
    // Predicated region
    $region46: #{tpu_custom_call.1} parent=1 // pred_check
      _
    $region47: #{tpu_custom_call.1} parent=1 // pred_check_branch
      %907 = sbr.rel (%p63) target = $region49
    $region48: #{tpu_custom_call.1} parent=1 // pred_region
      %v908 = vld [vmem:[#allocation3] sm:$0xff]
      %909 = vst [vmem:[#allocation10] sm:$0xff] %v908
    $region49: #{tpu_custom_call.1} parent=1 // pred_fallthru
      _
    // Predicated region
    $region50: #{tpu_custom_call.1} parent=1 // pred_check
      _
    $region51: #{tpu_custom_call.1} parent=1 // pred_check_branch
      %911 = sbr.rel (0) target = $region53
    $region52: #{tpu_custom_call.1} parent=1 // pred_region
      %s913 = ssub.s32 128, 128
      %914 = vsyncadd [#allocation6], %s913
      %s916 = sshll.u32 [#allocation10], 4
      %s917 = int_to_ptr.vmem [resolvable:$true] %s916
      %919 = dma.vmem_to_hbm [thread:$0]  %s917, 128, %s5, [#allocation6]
    $region53: #{tpu_custom_call.1} parent=1 // pred_fallthru
      _
    // Predicated region
    $region54: #{tpu_custom_call.1} parent=1 // pred_check
      _
    $region55: #{tpu_custom_call.1} parent=1 // pred_check_branch
      %921 = sbr.rel (0) target = $region57
    $region56: #{tpu_custom_call.1} parent=1 // pred_region
      %922 = dma.done [#allocation6], 128
    $region57: #{tpu_custom_call.1} parent=1 // pred_fallthru
      _
    %923 = vsyncpa [#allocation5], 1
    %924 = vsyncpa [#allocation8], 1
    %925 = vsyncpa [#allocation6], 1

</llo_original>
